<compile_context>
chip_gen: v5e
topology: v5e:2x2
jax: 0.10.0
libtpu: 0.0.40
codegen_flags: <defaults>
</compile_context>

<pallas_src>
import functools

import jax
import jax.numpy as jnp
from jax import lax
from jax.experimental import pallas as pl
from jax.experimental.pallas import tpu as pltpu

# ---------------- config (mirrors DepthAdapter __init__ cfg) ----------------
DEPTH_CLASSES = ['giant', 'extremely close', 'close', 'not in distance',
                 'a little remote', 'far', 'unseen']
BIN_LIST = [1.00, 1.50, 2.00, 2.25, 2.50, 2.75, 3.00]
N_BIN = len(BIN_LIST)
TEMPERATURE = 0.1
MAX_DEPTH = 10.0          # unused in forward (kept for config parity)
ALPHA = 0.2               # image_adapter weight
BETA = 0.2                # text_adapter weight
EMBED_DIM = 32            # CLIP embed dim (image == text -> F.interpolate scale == 1)
REDUCTION = 4
PATCH = 16

PACK_W = N_BIN + 1        # packed output lanes: [logits(0..6) | depth(7)]


def _round_up(x, m):
    return (x + m - 1) // m * m


# --------------------------- fused Pallas kernel -----------------------------
def _fused_tokens_kernel(alpha, x_ref, w1_ref, w2_ref, txt_ref, bins_ref, out_ref):
    """Per token tile [TM, D]:
         adapter MLP -> residual blend -> L2-normalize ->
         logits = img_n @ txt (temperature pre-folded into txt) ->
         softmax over bins -> depth = p @ bins ;
       packed output [TM, N_BIN + 1] = [logits | depth]."""
    x = x_ref[...].astype(jnp.float32)                              # [TM, D]
    w1 = w1_ref[...].astype(jnp.float32)                            # [D, D//r]
    w2 = w2_ref[...].astype(jnp.float32)                            # [D//r, D]

    # Adapter: relu(relu(x @ W1) @ W2); residual blend alpha*a + (1-alpha)*x
    h = jnp.maximum(jnp.dot(x, w1, preferred_element_type=jnp.float32), 0.0)
    a = jnp.maximum(jnp.dot(h, w2, preferred_element_type=jnp.float32), 0.0)
    f = alpha * a + (1.0 - alpha) * x                               # [TM, D]

    # F.normalize(f, dim=-1) with eps=1e-12  ==  f * rsqrt(max(sumsq, 1e-24))
    inv_norm = lax.rsqrt(jnp.maximum(jnp.sum(f * f, axis=-1, keepdims=True), 1e-24))
    img_n = f * inv_norm

    # txt_ref: pre-adapted, column-normalized, already divided by temperature.
    logits = jnp.dot(img_n, txt_ref[...].astype(jnp.float32),
                     preferred_element_type=jnp.float32)            # [TM, n_bin]

    # softmax over bins + EUP reciprocal for the denominator
    m = jnp.max(logits, axis=-1, keepdims=True)
    e = jnp.exp(logits - m)
    p = e * pl.reciprocal(jnp.sum(e, axis=-1, keepdims=True), approx=True)

    # depth = p @ bins  (MXU dot instead of cross-lane sum*bins reduce)
    depth = jnp.dot(p, bins_ref[...].astype(jnp.float32),
                    preferred_element_type=jnp.float32)             # [TM, 1]

    out_ref[:, :N_BIN] = logits.astype(out_ref.dtype)
    out_ref[:, N_BIN:] = depth.astype(out_ref.dtype)


def fused_depth_head(tokens, w1, w2, txt_mat, bins_col, alpha, *, tm_max=1024):
    """tokens: [N, D] (bf16/f32).  Returns packed [N, N_BIN+1] f32."""
    n, d = tokens.shape
    tm = min(tm_max, _round_up(n, 8))          # token tile (M >= 128/256 for real N)
    n_pad = _round_up(n, tm)
    if n_pad != n:
        tokens = jnp.pad(tokens, ((0, n_pad - n), (0, 0)))

    packed = pl.pallas_call(
        functools.partial(_fused_tokens_kernel, float(alpha)),
        out_shape=jax.ShapeDtypeStruct((n_pad, PACK_W), jnp.float32),
        grid=(n_pad // tm,),
        in_specs=[pl.BlockSpec((tm, d), lambda i: (i, 0)),          # token tiles
                  pl.BlockSpec(w1.shape, lambda i: (0, 0)),         # tiny weights
                  pl.BlockSpec(w2.shape, lambda i: (0, 0)),
                  pl.BlockSpec(txt_mat.shape, lambda i: (0, 0)),
                  pl.BlockSpec(bins_col.shape, lambda i: (0, 0))],
        out_specs=pl.BlockSpec((tm, PACK_W), lambda i: (i, 0)),
        compiler_params=pltpu.CompilerParams(
            dimension_semantics=("parallel",)),                     # megacore / v7x
    )(tokens, w1, w2, txt_mat, bins_col)
    return packed[:n]


# ----------------- text branch (tiny [n_bin, D]): plain JAX ------------------
# A pallas_call on a 7x32 tensor is pure launch overhead; compute it once here
# and feed the kernel a pre-normalized, temperature-folded [D, n_bin] operand.
def text_head(text_features, w1, w2, beta, temperature):
    a = jnp.maximum(jnp.maximum(text_features @ w1, 0.0) @ w2, 0.0)   # Adapter
    t = beta * a + (1.0 - beta) * text_features                      # [n_bin, D]
    t = t.T                                                          # [D, n_bin]
    t = t / jnp.maximum(jnp.linalg.norm(t, axis=0, keepdims=True), 1e-12)
    return t / temperature                                           # fold 1/T


# -------------------- surrogate frozen CLIP (plain-JAX glue) -----------------
# TODO(synk): the real pretrained CLIP image/text encoders cannot be loaded;
# replaced by a deterministic patch-embed projection (image) and synthetic
# L2-normalized class embeddings (text).
def surrogate_clip_encode_image(x, w_patch):
    b, c, h, w = x.shape
    gh, gw = h // PATCH, w // PATCH
    p = x.reshape(b, c, gh, PATCH, gw, PATCH).transpose(0, 2, 4, 1, 3, 5)
    p = p.reshape(b, gh * gw, c * PATCH * PATCH)
    return p @ w_patch                                               # [B, L, D]


# ------------------------------ forward --------------------------------------
def depth_adapter_forward(x, params):
    B, C, H, W = x.shape

    # --- encode_text ---------------------------------------------------------
    txt_mat = text_head(params['text_features'], params['text_w1'],
                        params['text_w2'], BETA, TEMPERATURE)        # [D, n_bin]

    # --- encode_image --------------------------------------------------------
    tokens = surrogate_clip_encode_image(x, params['w_patch'])       # [B, L, D]
    _, L, D = tokens.shape
    # bf16 token stream halves the dominant HBM read traffic; kernel compute is f32.
    img_flat = tokens.reshape(B * L, D).astype(jnp.bfloat16)

    # scale = text_f.shape[0] / D == 1 here, so F.interpolate is the identity.
    # TODO(synk): nearest interpolate for mismatched text/image embed dims not implemented.

    bins_col = jnp.asarray(BIN_LIST, jnp.float32).reshape(N_BIN, 1)

    # --- fused adapter + logits + softmax + depth (single Pallas kernel) -----
    packed = fused_depth_head(img_flat, params['img_w1'], params['img_w2'],
                              txt_mat, bins_col, ALPHA)              # [B*L, 8]
    logits_flat = packed[:, :N_BIN]
    depth_flat = packed[:, N_BIN]

    Hp, Wp = H // 16, W // 16
    if Hp * Wp > L:                       # mirrors the PyTorch fallback
        Hp, Wp = Hp // 2, Wp // 2
    depth_logits = (logits_flat.reshape(B, L, N_BIN)
                    .transpose(0, 2, 1)
                    .reshape(B, N_BIN, Hp, Wp))
    depth = depth_flat.reshape(B, Hp, Wp)[:, None, :, :]
    return depth, depth_logits


# ------------------------------ param init -----------------------------------
def init_params(key):
    k1, k2, k3, k4, k5, k6 = jax.random.split(key, 6)
    D, R = EMBED_DIM, REDUCTION
    tf = jax.random.normal(k1, (N_BIN, D), jnp.float32)
    tf = tf / jnp.linalg.norm(tf, axis=-1, keepdims=True)     # CLIP-normalized text feats
    return dict(
        text_features=tf,
        w_patch=0.02 * jax.random.normal(k2, (3 * PATCH * PATCH, D), jnp.float32),
        img_w1=0.05 * jax.random.normal(k3, (D, D // R), jnp.float32),
        img_w2=0.05 * jax.random.normal(k4, (D // R, D), jnp.float32),
        text_w1=0.05 * jax.random.normal(k5, (D, D // R), jnp.float32),
        text_w2=0.05 * jax.random.normal(k6, (D // R, D), jnp.float32),
    )


if __name__ == "__main__":
    key = jax.random.PRNGKey(0)
    params = init_params(key)
    x = jax.random.normal(jax.random.fold_in(key, 99), (2, 3, 64, 64), jnp.float32)

    depth, depth_logits = depth_adapter_forward(x, params)
    depth = jax.block_until_ready(depth)
    depth_logits = jax.block_until_ready(depth_logits)

    assert depth.shape == (2, 1, 4, 4), depth.shape
    assert depth_logits.shape == (2, N_BIN, 4, 4), depth_logits.shape
    assert bool(jnp.all(jnp.isfinite(depth))) and bool(jnp.all(jnp.isfinite(depth_logits)))
    # depth is a convex combination of bin values (approx. softmax reciprocal -> loose tol)
    assert float(jnp.min(depth)) >= min(BIN_LIST) - 1e-2
    assert float(jnp.max(depth)) <= max(BIN_LIST) + 1e-2
    print("KERNEL_OK")
</pallas_src>

<mosaic_0001>
module attributes {stable_mosaic.version = 11 : i64} {
  func.func @_fused_tokens_kernel(%arg0: i32, %arg1: memref<32x32xbf16, #tpu.memory_space<vmem>>, %arg2: memref<32x8xf32, #tpu.memory_space<vmem>>, %arg3: memref<8x32xf32, #tpu.memory_space<vmem>>, %arg4: memref<32x7xf32, #tpu.memory_space<vmem>>, %arg5: memref<7x1xf32, #tpu.memory_space<vmem>>, %arg6: memref<32x8xf32, #tpu.memory_space<vmem>>) attributes {dimension_semantics = [#tpu.dimension_semantics<parallel>], iteration_bounds = array<i64: 1>, scalar_prefetch = 0 : i64, scratch_operands = 0 : i64, tpu.core_type = #tpu.core_type<tc>, window_params = [{transform_indices = @transform_0, window_bounds = array<i64: 32, 32>}, {pipeline_mode = #tpu.pipeline_mode<synchronous>, transform_indices = @transform_1, window_bounds = array<i64: 32, 8>}, {pipeline_mode = #tpu.pipeline_mode<synchronous>, transform_indices = @transform_2, window_bounds = array<i64: 8, 32>}, {pipeline_mode = #tpu.pipeline_mode<synchronous>, transform_indices = @transform_3, window_bounds = array<i64: 32, 7>}, {pipeline_mode = #tpu.pipeline_mode<synchronous>, transform_indices = @transform_4, window_bounds = array<i64: 7, 1>}, {transform_indices = @transform_5, window_bounds = array<i64: 32, 8>}]} {
    %c0 = arith.constant 0 : index
    %c0_0 = arith.constant 0 : index
    %0 = vector.load %arg1[%c0, %c0_0] : memref<32x32xbf16, #tpu.memory_space<vmem>>, vector<32x32xbf16>
    %1 = arith.extf %0 : vector<32x32xbf16> to vector<32x32xf32>
    %c0_1 = arith.constant 0 : index
    %c0_2 = arith.constant 0 : index
    %2 = vector.load %arg2[%c0_1, %c0_2] : memref<32x8xf32, #tpu.memory_space<vmem>>, vector<32x8xf32>
    %c0_3 = arith.constant 0 : index
    %c0_4 = arith.constant 0 : index
    %3 = vector.load %arg3[%c0_3, %c0_4] : memref<8x32xf32, #tpu.memory_space<vmem>>, vector<8x32xf32>
    %cst = arith.constant dense<0.000000e+00> : vector<32x8xf32>
    %4 = tpu.matmul %1, %2, %cst {dimension_numbers = #tpu.dot_dimension_numbers<[1], [0], [0], [1], [0, 0, 1, 1], [], []>} : vector<32x32xf32>, vector<32x8xf32>, vector<32x8xf32> -> vector<32x8xf32>
    %cst_5 = arith.constant 0.000000e+00 : f32
    %5 = vector.broadcast %cst_5 : f32 to vector<32x8xf32>
    %6 = arith.maximumf %4, %5 : vector<32x8xf32>
    %cst_6 = arith.constant dense<0.000000e+00> : vector<32x32xf32>
    %7 = tpu.matmul %6, %3, %cst_6 {dimension_numbers = #tpu.dot_dimension_numbers<[1], [0], [0], [1], [0, 0, 1, 1], [], []>} : vector<32x8xf32>, vector<8x32xf32>, vector<32x32xf32> -> vector<32x32xf32>
    %cst_7 = arith.constant 0.000000e+00 : f32
    %8 = vector.broadcast %cst_7 : f32 to vector<32x32xf32>
    %9 = arith.maximumf %7, %8 : vector<32x32xf32>
    %cst_8 = arith.constant 2.000000e-01 : f32
    %10 = vector.broadcast %cst_8 : f32 to vector<32x32xf32>
    %11 = arith.mulf %10, %9 : vector<32x32xf32>
    %cst_9 = arith.constant 8.000000e-01 : f32
    %12 = vector.broadcast %cst_9 : f32 to vector<32x32xf32>
    %13 = arith.mulf %12, %1 : vector<32x32xf32>
    %14 = arith.addf %11, %13 : vector<32x32xf32>
    %15 = arith.mulf %14, %14 : vector<32x32xf32>
    %cst_10 = arith.constant dense<0.000000e+00> : vector<32xf32>
    %16 = vector.multi_reduction <add>, %15, %cst_10 [1] : vector<32x32xf32> to vector<32xf32>
    %17 = vector.shape_cast %16 : vector<32xf32> to vector<32x1xf32>
    %cst_11 = arith.constant 1.000000e-24 : f32
    %18 = vector.broadcast %cst_11 : f32 to vector<32x1xf32>
    %19 = arith.maximumf %17, %18 : vector<32x1xf32>
    %20 = math.rsqrt %19 : vector<32x1xf32>
    %21 = vector.broadcast %20 : vector<32x1xf32> to vector<32x32xf32>
    %22 = arith.mulf %14, %21 : vector<32x32xf32>
    %c0_12 = arith.constant 0 : index
    %c0_13 = arith.constant 0 : index
    %23 = vector.load %arg4[%c0_12, %c0_13] : memref<32x7xf32, #tpu.memory_space<vmem>>, vector<32x7xf32>
    %cst_14 = arith.constant dense<0.000000e+00> : vector<32x7xf32>
    %24 = tpu.matmul %22, %23, %cst_14 {dimension_numbers = #tpu.dot_dimension_numbers<[1], [0], [0], [1], [0, 0, 1, 1], [], []>} : vector<32x32xf32>, vector<32x7xf32>, vector<32x7xf32> -> vector<32x7xf32>
    %cst_15 = arith.constant dense<0xFF800000> : vector<32xf32>
    %25 = vector.multi_reduction <maximumf>, %24, %cst_15 [1] : vector<32x7xf32> to vector<32xf32>
    %26 = vector.shape_cast %25 : vector<32xf32> to vector<32x1xf32>
    %27 = vector.broadcast %26 : vector<32x1xf32> to vector<32x7xf32>
    %28 = arith.subf %24, %27 : vector<32x7xf32>
    %29 = math.exp %28 : vector<32x7xf32>
    %cst_16 = arith.constant dense<0.000000e+00> : vector<32xf32>
    %30 = vector.multi_reduction <add>, %29, %cst_16 [1] : vector<32x7xf32> to vector<32xf32>
    %31 = vector.shape_cast %30 : vector<32xf32> to vector<32x1xf32>
    %32 = tpu.reciprocal %31 {approx = true} : vector<32x1xf32> -> vector<32x1xf32>
    %33 = vector.broadcast %32 : vector<32x1xf32> to vector<32x7xf32>
    %34 = arith.mulf %29, %33 : vector<32x7xf32>
    %c0_17 = arith.constant 0 : index
    %c0_18 = arith.constant 0 : index
    %35 = vector.load %arg5[%c0_17, %c0_18] : memref<7x1xf32, #tpu.memory_space<vmem>>, vector<7x1xf32>
    %cst_19 = arith.constant dense<0.000000e+00> : vector<32x1xf32>
    %36 = tpu.matmul %34, %35, %cst_19 {dimension_numbers = #tpu.dot_dimension_numbers<[1], [0], [0], [1], [0, 0, 1, 1], [], []>} : vector<32x7xf32>, vector<7x1xf32>, vector<32x1xf32> -> vector<32x1xf32>
    %c0_20 = arith.constant 0 : index
    %c0_21 = arith.constant 0 : index
    %37 = vector.load %arg6[%c0_20, %c0_21] : memref<32x8xf32, #tpu.memory_space<vmem>>, vector<32x7xf32>
    tpu.vector_store %arg6[%c0_20, %c0_21], %24 {strides = array<i32>} : memref<32x8xf32, #tpu.memory_space<vmem>>, vector<32x7xf32>,
    %c0_22 = arith.constant 0 : index
    %c7 = arith.constant 7 : index
    %38 = vector.load %arg6[%c0_22, %c7] : memref<32x8xf32, #tpu.memory_space<vmem>>, vector<32x1xf32>
    tpu.vector_store %arg6[%c0_22, %c7], %36 {strides = array<i32>} : memref<32x8xf32, #tpu.memory_space<vmem>>, vector<32x1xf32>,
    return
  }
  func.func @transform_0(%arg0: i32) -> (i32, i32) {
    %c0_i32 = arith.constant 0 : i32
    %c0_i32_0 = arith.constant 0 : i32
    return %arg0, %c0_i32 : i32, i32
  }
  func.func @transform_1(%arg0: i32) -> (i32, i32) {
    %c0_i32 = arith.constant 0 : i32
    %c0_i32_0 = arith.constant 0 : i32
    %c0_i32_1 = arith.constant 0 : i32
    return %c0_i32, %c0_i32_0 : i32, i32
  }
  func.func @transform_2(%arg0: i32) -> (i32, i32) {
    %c0_i32 = arith.constant 0 : i32
    %c0_i32_0 = arith.constant 0 : i32
    %c0_i32_1 = arith.constant 0 : i32
    return %c0_i32, %c0_i32_0 : i32, i32
  }
  func.func @transform_3(%arg0: i32) -> (i32, i32) {
    %c0_i32 = arith.constant 0 : i32
    %c0_i32_0 = arith.constant 0 : i32
    %c0_i32_1 = arith.constant 0 : i32
    return %c0_i32, %c0_i32_0 : i32, i32
  }
  func.func @transform_4(%arg0: i32) -> (i32, i32) {
    %c0_i32 = arith.constant 0 : i32
    %c0_i32_0 = arith.constant 0 : i32
    %c0_i32_1 = arith.constant 0 : i32
    return %c0_i32, %c0_i32_0 : i32, i32
  }
  func.func @transform_5(%arg0: i32) -> (i32, i32) {
    %c0_i32 = arith.constant 0 : i32
    %c0_i32_0 = arith.constant 0 : i32
    return %arg0, %c0_i32 : i32, i32
  }
}

</mosaic_0001>

<llo_original>
// kernel: tpu_custom_call.1
$region0: #{tpu_custom_call.1}
  #allocation0 [shape = 'u32[]', space=smem, size = 0x4, offset = 0x4, fixed_abs, tag = 'smem constant byte address 0x4 - core index']
  #allocation1 [shape = 'u32[72,128]{1,0:T(1,128)}', space=vmem, size = 0x9000, scoped, tag = 'internal scratch']
  %s0 = inlined_call_operand.vmem [shape: bf16[32,32], index: 0, kind: input, shape index: {}]
  %s1 = inlined_call_operand.vmem [shape: f32[32,8], index: 1, kind: input, shape index: {}]
  %s2 = inlined_call_operand.vmem [shape: f32[8,32], index: 2, kind: input, shape index: {}]
  %s3 = inlined_call_operand.vmem [shape: f32[32,7], index: 3, kind: input, shape index: {}]
  %s4 = inlined_call_operand.vmem [shape: f32[7,1], index: 4, kind: input, shape index: {}]
  %s5 = inlined_call_operand.vmem [shape: f32[32,8], index: 5, kind: output, shape index: {}]
  %s6 = sld [smem:[#allocation0]]
  $region30: #{tpu_custom_call.1} parent=0
    _
  %s8 = ssub.s32 1, %s6
  %s9 = scalar_select 0, %s8, %s6
  // Predicated region
  $region2: #{tpu_custom_call.1} parent=0 // pred_check
    _
  $region3: #{tpu_custom_call.1} parent=0 // pred_check_branch
    %11 = sbr.rel (0) target = $region5
  $region4: #{tpu_custom_call.1} parent=0 // pred_region
    _
  $region5: #{tpu_custom_call.1} parent=0 // pred_fallthru
    _
  // Predicated region
  $region6: #{tpu_custom_call.1} parent=0 // pred_check
    _
  $region7: #{tpu_custom_call.1} parent=0 // pred_check_branch
    %13 = sbr.rel (0) target = $region9
  $region8: #{tpu_custom_call.1} parent=0 // pred_region
    _
  $region9: #{tpu_custom_call.1} parent=0 // pred_fallthru
    _
  // Predicated region
  $region10: #{tpu_custom_call.1} parent=0 // pred_check
    _
  $region11: #{tpu_custom_call.1} parent=0 // pred_check_branch
    %15 = sbr.rel (0) target = $region13
  $region12: #{tpu_custom_call.1} parent=0 // pred_region
    _
  $region13: #{tpu_custom_call.1} parent=0 // pred_fallthru
    _
  // Predicated region
  $region14: #{tpu_custom_call.1} parent=0 // pred_check
    _
  $region15: #{tpu_custom_call.1} parent=0 // pred_check_branch
    %17 = sbr.rel (0) target = $region17
  $region16: #{tpu_custom_call.1} parent=0 // pred_region
    _
  $region17: #{tpu_custom_call.1} parent=0 // pred_fallthru
    _
  // Predicated region
  $region18: #{tpu_custom_call.1} parent=0 // pred_check
    _
  $region19: #{tpu_custom_call.1} parent=0 // pred_check_branch
    %19 = sbr.rel (0) target = $region21
  $region20: #{tpu_custom_call.1} parent=0 // pred_region
    _
  $region21: #{tpu_custom_call.1} parent=0 // pred_fallthru
    _
  %v20 = vld [vmem:[%s0] sm:$0xf]
  %v21 = vld [vmem:[%s0 + $0x4] sm:$0xf]
  %v22 = vld [vmem:[%s0 + $0x8] sm:$0xf]
  %v23 = vld [vmem:[%s0 + $0xc] sm:$0xf]
  %v24 = vunpack.c.l.bf16 %v20
  %v25 = vunpack.c.l.bf16 %v21
  %v26 = vunpack.c.l.bf16 %v22
  %v27 = vunpack.c.l.bf16 %v23
  %v28 = vld [vmem:[%s1] sm:$0xff]
  %v29 = vld [vmem:[%s1 + $0x8] sm:$0xff]
  %v30 = vld [vmem:[%s1 + $0x10] sm:$0xff]
  %v31 = vld [vmem:[%s1 + $0x18] sm:$0xff]
  %v32 = vld [vmem:[%s2] sm:$0xff]
  %vm33 = vcmask 261120
  %v35 = vsel %vm33, %v24, 0
  %v38 = vsel %vm33, %v25, 0
  %v41 = vsel %vm33, %v26, 0
  %v44 = vsel %vm33, %v27, 0
  %46 = vmatpush.msra.mxu0 0.0
  %47 = vmatpush.msra.mxu0 0.0
  %48 = vmatpush.msra.mxu0 0.0
  %49 = vmatpush.msra.mxu0 0.0
  %50 = vmatpush.msra.mxu0 0.0
  %51 = vmatpush.msra.mxu0 0.0
  %52 = vmatpush.msra.mxu0 0.0
  %53 = vmatpush.msra.mxu0 0.0
  %54 = vmatpush.msra.mxu0 0.0
  %55 = vmatpush.msra.mxu0 0.0
  %56 = vmatpush.msra.mxu0 0.0
  %57 = vmatpush.msra.mxu0 0.0
  %58 = vmatpush.msra.mxu0 %v31
  %59 = vmatpush.msra.mxu0 %v30
  %60 = vmatpush.msra.mxu0 %v29
  %61 = vmatpush.msra.mxu0 %v28
  %62 = vmatmul.f32.gmra.mxu0 %v35
  %v63 = vpop.f32.mrf.mxu0
  %v64 = vadd.f32 0.0, %v63
  %65 = vmatmul.f32.gmra.mxu0 %v38
  %v66 = vpop.f32.mrf.mxu0
  %v67 = vadd.f32 0.0, %v66
  %68 = vmatmul.f32.gmra.mxu0 %v41
  %v69 = vpop.f32.mrf.mxu0
  %v70 = vadd.f32 0.0, %v69
  %71 = vmatmul.f32.gmra.mxu0 %v44
  %v72 = vpop.f32.mrf.mxu0
  %v73 = vadd.f32 0.0, %v72
  %74 = vdwg.mxu0
  %v75 = vmax.f32 %v64, 0.0
  %v76 = vmax.f32 %v67, 0.0
  %v77 = vmax.f32 %v70, 0.0
  %v78 = vmax.f32 %v73, 0.0
  %vm79 = vcmask 64512
  %v81 = vsel %vm79, %v75, 0
  %v84 = vsel %vm79, %v76, 0
  %v87 = vsel %vm79, %v77, 0
  %v90 = vsel %vm79, %v78, 0
  %92 = vmatpush.msra.mxu0 0.0
  %93 = vmatpush.msra.mxu0 0.0
  %94 = vmatpush.msra.mxu0 0.0
  %95 = vmatpush.msra.mxu0 0.0
  %96 = vmatpush.msra.mxu0 0.0
  %97 = vmatpush.msra.mxu0 0.0
  %98 = vmatpush.msra.mxu0 0.0
  %99 = vmatpush.msra.mxu0 0.0
  %100 = vmatpush.msra.mxu0 0.0
  %101 = vmatpush.msra.mxu0 0.0
  %102 = vmatpush.msra.mxu0 0.0
  %103 = vmatpush.msra.mxu0 0.0
  %104 = vmatpush.msra.mxu0 0.0
  %105 = vmatpush.msra.mxu0 0.0
  %106 = vmatpush.msra.mxu0 0.0
  %107 = vmatpush.msra.mxu0 %v32
  %108 = vmatmul.f32.gmra.mxu0 %v81
  %v109 = vpop.f32.mrf.mxu0
  %v110 = vadd.f32 0.0, %v109
  %111 = vmatmul.f32.gmra.mxu0 %v84
  %v112 = vpop.f32.mrf.mxu0
  %v113 = vadd.f32 0.0, %v112
  %114 = vmatmul.f32.gmra.mxu0 %v87
  %v115 = vpop.f32.mrf.mxu0
  %v116 = vadd.f32 0.0, %v115
  %117 = vmatmul.f32.gmra.mxu0 %v90
  %v118 = vpop.f32.mrf.mxu0
  %v119 = vadd.f32 0.0, %v118
  %120 = vdwg.mxu0
  %v121 = vmax.f32 %v110, 0.0
  %v122 = vmax.f32 %v113, 0.0
  %v123 = vmax.f32 %v116, 0.0
  %v124 = vmax.f32 %v119, 0.0
  %v125 = vmul.f32 %v121, 0.2
  %v126 = vmul.f32 %v122, 0.2
  %v127 = vmul.f32 %v123, 0.2
  %v128 = vmul.f32 %v124, 0.2
  %v129 = vmul.f32 %v24, 0.8
  %v130 = vmul.f32 %v25, 0.8
  %v131 = vmul.f32 %v26, 0.8
  %v132 = vmul.f32 %v27, 0.8
  %v133 = vadd.f32 %v125, %v129
  %v134 = vadd.f32 %v126, %v130
  %v135 = vadd.f32 %v127, %v131
  %v136 = vadd.f32 %v128, %v132
  %v137 = vmul.f32 %v133, %v133
  %v138 = vmul.f32 %v134, %v134
  %v139 = vmul.f32 %v135, %v135
  %v140 = vmul.f32 %v136, %v136
  %v141 = vsel %vm33, %v137, 0.0
  %142 = vadd.xlane.f32.xlu0 %v141
  %v143 = vpop.xlane.xlu0 %142
  %v144 = vsel %vm33, %v138, 0.0
  %145 = vadd.xlane.f32.xlu0 %v144
  %v146 = vpop.xlane.xlu0 %145
  %v147 = vsel %vm33, %v139, 0.0
  %148 = vadd.xlane.f32.xlu0 %v147
  %v149 = vpop.xlane.xlu0 %148
  %v150 = vsel %vm33, %v140, 0.0
  %151 = vadd.xlane.f32.xlu0 %v150
  %v152 = vpop.xlane.xlu0 %151
  %v153 = vmax.f32 %v143, 1e-24
  %v154 = vmax.f32 %v146, 1e-24
  %v155 = vmax.f32 %v149, 1e-24
  %v156 = vmax.f32 %v152, 1e-24
  %v157 = vrsqrt.pop %v153
  %v158 = vmul.f32 %v157, %v153
  %v159 = vmul.f32 %v158, %v157
  %v160 = vmul.f32 0.5, %v159
  %v161 = vsub.f32 1.5, %v160
  %v162 = vmul.f32 %v157, %v161
  %vm163 = vweird.f32 %v153
  %vm164 = vweird.f32 %v157
  %vm165 = vmor %vm163, %vm164
  %v166 = vsel %vm165, %v157, %v162
  %v167 = vrsqrt.pop %v154
  %v168 = vmul.f32 %v167, %v154
  %v169 = vmul.f32 %v168, %v167
  %v170 = vmul.f32 0.5, %v169
  %v171 = vsub.f32 1.5, %v170
  %v172 = vmul.f32 %v167, %v171
  %vm173 = vweird.f32 %v154
  %vm174 = vweird.f32 %v167
  %vm175 = vmor %vm173, %vm174
  %v176 = vsel %vm175, %v167, %v172
  %v177 = vrsqrt.pop %v155
  %v178 = vmul.f32 %v177, %v155
  %v179 = vmul.f32 %v178, %v177
  %v180 = vmul.f32 0.5, %v179
  %v181 = vsub.f32 1.5, %v180
  %v182 = vmul.f32 %v177, %v181
  %vm183 = vweird.f32 %v155
  %vm184 = vweird.f32 %v177
  %vm185 = vmor %vm183, %vm184
  %v186 = vsel %vm185, %v177, %v182
  %v187 = vrsqrt.pop %v156
  %v188 = vmul.f32 %v187, %v156
  %v189 = vmul.f32 %v188, %v187
  %v190 = vmul.f32 0.5, %v189
  %v191 = vsub.f32 1.5, %v190
  %v192 = vmul.f32 %v187, %v191
  %vm193 = vweird.f32 %v156
  %vm194 = vweird.f32 %v187
  %vm195 = vmor %vm193, %vm194
  %v196 = vsel %vm195, %v187, %v192
  %v197 = vmul.f32 %v133, %v166
  %v198 = vmul.f32 %v134, %v176
  %v199 = vmul.f32 %v135, %v186
  %v200 = vmul.f32 %v136, %v196
  %v201 = vld [vmem:[%s3] sm:$0xff]
  %v202 = vld [vmem:[%s3 + $0x8] sm:$0xff]
  %v203 = vld [vmem:[%s3 + $0x10] sm:$0xff]
  %v204 = vld [vmem:[%s3 + $0x18] sm:$0xff]
  %v206 = vsel %vm33, %v197, 0
  %v209 = vsel %vm33, %v198, 0
  %v212 = vsel %vm33, %v199, 0
  %v215 = vsel %vm33, %v200, 0
  %217 = vmatpush.msra.mxu0 0.0
  %218 = vmatpush.msra.mxu0 0.0
  %219 = vmatpush.msra.mxu0 0.0
  %220 = vmatpush.msra.mxu0 0.0
  %221 = vmatpush.msra.mxu0 0.0
  %222 = vmatpush.msra.mxu0 0.0
  %223 = vmatpush.msra.mxu0 0.0
  %224 = vmatpush.msra.mxu0 0.0
  %225 = vmatpush.msra.mxu0 0.0
  %226 = vmatpush.msra.mxu0 0.0
  %227 = vmatpush.msra.mxu0 0.0
  %228 = vmatpush.msra.mxu0 0.0
  %229 = vmatpush.msra.mxu0 %v204
  %230 = vmatpush.msra.mxu0 %v203
  %231 = vmatpush.msra.mxu0 %v202
  %232 = vmatpush.msra.mxu0 %v201
  %233 = vmatmul.f32.gmra.mxu0 %v206
  %v234 = vpop.f32.mrf.mxu0
  %v235 = vadd.f32 0.0, %v234
  %236 = vmatmul.f32.gmra.mxu0 %v209
  %v237 = vpop.f32.mrf.mxu0
  %v238 = vadd.f32 0.0, %v237
  %239 = vmatmul.f32.gmra.mxu0 %v212
  %v240 = vpop.f32.mrf.mxu0
  %v241 = vadd.f32 0.0, %v240
  %242 = vmatmul.f32.gmra.mxu0 %v215
  %v243 = vpop.f32.mrf.mxu0
  %v244 = vadd.f32 0.0, %v243
  %245 = vdwg.mxu0
  %vm246 = vcmask 56320
  %v247 = vsel %vm246, %v235, -inf
  %248 = vmax.xlane.f32.xlu0 %v247
  %v249 = vpop.xlane.xlu0 %248
  %v250 = vsel %vm246, %v238, -inf
  %251 = vmax.xlane.f32.xlu0 %v250
  %v252 = vpop.xlane.xlu0 %251
  %v253 = vsel %vm246, %v241, -inf
  %254 = vmax.xlane.f32.xlu0 %v253
  %v255 = vpop.xlane.xlu0 %254
  %v256 = vsel %vm246, %v244, -inf
  %257 = vmax.xlane.f32.xlu0 %v256
  %v258 = vpop.xlane.xlu0 %257
  %v259 = vsub.f32 %v235, %v249
  %v260 = vsub.f32 %v238, %v252
  %v261 = vsub.f32 %v241, %v255
  %v262 = vsub.f32 %v244, %v258
  %v263 = vmul.f32 %v259, 1.442695
  %v264 = vpow.pop %v263
  %v265 = vmul.f32 %v260, 1.442695
  %v266 = vpow.pop %v265
  %v267 = vmul.f32 %v261, 1.442695
  %v268 = vpow.pop %v267
  %v269 = vmul.f32 %v262, 1.442695
  %v270 = vpow.pop %v269
  %v271 = vsel %vm246, %v264, 0.0
  %272 = vadd.xlane.f32.xlu0 %v271
  %v273 = vpop.xlane.xlu0 %272
  %v274 = vsel %vm246, %v266, 0.0
  %275 = vadd.xlane.f32.xlu0 %v274
  %v276 = vpop.xlane.xlu0 %275
  %v277 = vsel %vm246, %v268, 0.0
  %278 = vadd.xlane.f32.xlu0 %v277
  %v279 = vpop.xlane.xlu0 %278
  %v280 = vsel %vm246, %v270, 0.0
  %281 = vadd.xlane.f32.xlu0 %v280
  %v282 = vpop.xlane.xlu0 %281
  %v283 = vrcp.pop %v273
  %v284 = vrcp.pop %v276
  %v285 = vrcp.pop %v279
  %v286 = vrcp.pop %v282
  %v287 = vmul.f32 %v264, %v283
  %v288 = vmul.f32 %v266, %v284
  %v289 = vmul.f32 %v268, %v285
  %v290 = vmul.f32 %v270, %v286
  %v291 = vld [vmem:[%s4] sm:$0x7f]
  %v293 = vsel %vm246, %v287, 0
  %v296 = vsel %vm246, %v288, 0
  %v299 = vsel %vm246, %v289, 0
  %v302 = vsel %vm246, %v290, 0
  %vm304 = vcmask 1046528
  %v306 = vsel %vm304, %v291, 0
  %308 = vmatpush.msra.mxu0 0.0
  %309 = vmatpush.msra.mxu0 0.0
  %310 = vmatpush.msra.mxu0 0.0
  %311 = vmatpush.msra.mxu0 0.0
  %312 = vmatpush.msra.mxu0 0.0
  %313 = vmatpush.msra.mxu0 0.0
  %314 = vmatpush.msra.mxu0 0.0
  %315 = vmatpush.msra.mxu0 0.0
  %316 = vmatpush.msra.mxu0 0.0
  %317 = vmatpush.msra.mxu0 0.0
  %318 = vmatpush.msra.mxu0 0.0
  %319 = vmatpush.msra.mxu0 0.0
  %320 = vmatpush.msra.mxu0 0.0
  %321 = vmatpush.msra.mxu0 0.0
  %322 = vmatpush.msra.mxu0 0.0
  %323 = vmatpush.msra.mxu0 %v306
  %324 = vmatmul.f32.gmra.mxu0 %v293
  %v325 = vpop.f32.mrf.mxu0
  %v326 = vadd.f32 0.0, %v325
  %327 = vmatmul.f32.gmra.mxu0 %v296
  %v328 = vpop.f32.mrf.mxu0
  %v329 = vadd.f32 0.0, %v328
  %330 = vmatmul.f32.gmra.mxu0 %v299
  %v331 = vpop.f32.mrf.mxu0
  %v332 = vadd.f32 0.0, %v331
  %333 = vmatmul.f32.gmra.mxu0 %v302
  %v334 = vpop.f32.mrf.mxu0
  %v335 = vadd.f32 0.0, %v334
  %336 = vdwg.mxu0
  %337 = vst.msk [vmem:[%s5] sm:$0xff] %vm246, %v235
  %338 = vst.msk [vmem:[%s5 + $0x8] sm:$0xff] %vm246, %v238
  %339 = vst.msk [vmem:[%s5 + $0x10] sm:$0xff] %vm246, %v241
  %340 = vst.msk [vmem:[%s5 + $0x18] sm:$0xff] %vm246, %v244
  %345 = vrot.lane.b32.xlu0 %v326, 7
  %v346 = vpop.permute.xlu0 %345
  %347 = vrot.lane.b32.xlu0 %v329, 7
  %v348 = vpop.permute.xlu0 %347
  %349 = vrot.lane.b32.xlu0 %v332, 7
  %v350 = vpop.permute.xlu0 %349
  %351 = vrot.lane.b32.xlu0 %v335, 7
  %v352 = vpop.permute.xlu0 %351
  %vm357 = vcmask 64568
  %358 = vst.msk [vmem:[%s5] sm:$0xff] %vm357, %v346
  %359 = vst.msk [vmem:[%s5 + $0x8] sm:$0xff] %vm357, %v348
  %360 = vst.msk [vmem:[%s5 + $0x10] sm:$0xff] %vm357, %v350
  %361 = vst.msk [vmem:[%s5 + $0x18] sm:$0xff] %vm357, %v352
  // Predicated region
  $region22: #{tpu_custom_call.1} parent=0 // pred_check
    _
  $region23: #{tpu_custom_call.1} parent=0 // pred_check_branch
    %363 = sbr.rel (0) target = $region25
  $region24: #{tpu_custom_call.1} parent=0 // pred_region
    _
  $region25: #{tpu_custom_call.1} parent=0 // pred_fallthru
    _
  // Predicated region
  $region26: #{tpu_custom_call.1} parent=0 // pred_check
    _
  $region27: #{tpu_custom_call.1} parent=0 // pred_check_branch
    %365 = sbr.rel (0) target = $region29
  $region28: #{tpu_custom_call.1} parent=0 // pred_region
    _
  $region29: #{tpu_custom_call.1} parent=0 // pred_fallthru
    _

</llo_original>
